<compile_context>
chip_gen: v6e
topology: v6e:2x2x1
jax: 0.10.0
libtpu: 0.0.40
codegen_flags: <defaults>
</compile_context>

<pallas_src>
import functools

import jax
import jax.numpy as jnp
from jax.experimental import pallas as pl
from jax.experimental.pallas import tpu as pltpu

LANE = 128     # lane width: pad every feature dim to a multiple of this
SUBLANE = 8    # sublane width: minimum batch-tile granularity
MAX_TILE_B = 128  # batch tile for large batches (one MXU-pass worth of rows)


def _round_up(n, m):
    return (n + m - 1) // m * m


def _mlp_kernel(x_ref, w1_ref, b1_ref, w2_ref, b2_ref, w3_ref, b3_ref, o_ref):
    # Layer 1: Linear + ReLU (all dims lane-dense)
    h1 = jnp.dot(x_ref[...], w1_ref[...], preferred_element_type=jnp.float32)
    h1 = jnp.maximum(h1 + b1_ref[...], 0.0)
    # Layer 2: Linear + ReLU
    h2 = jnp.dot(h1, w2_ref[...], preferred_element_type=jnp.float32)
    h2 = jnp.maximum(h2 + b2_ref[...], 0.0)
    # Layer 3: Linear (no activation). Padded output columns are exactly 0.
    out = jnp.dot(h2, w3_ref[...], preferred_element_type=jnp.float32) + b3_ref[...]
    o_ref[...] = out.astype(o_ref.dtype)


def _pad2d(a, rows, cols):
    r, c = a.shape
    return jnp.pad(a, ((0, rows - r), (0, cols - c)))


def pad_params(params):
    """Zero-pad weights/biases to lane-dense (128-multiple) shapes, once at init."""
    w1, b1, w2, b2, w3, b3 = params
    in_p = _round_up(w1.shape[0], LANE)
    hid_p = _round_up(w1.shape[1], LANE)
    out_p = _round_up(w3.shape[1], LANE)
    # Zero weights AND zero biases in padded lanes -> padded hidden lanes stay 0
    # through ReLU, padded output lanes stay 0 and are sliced away.
    return (
        _pad2d(w1, in_p, hid_p), _pad2d(b1, 1, hid_p),
        _pad2d(w2, hid_p, hid_p), _pad2d(b2, 1, hid_p),
        _pad2d(w3, hid_p, out_p), _pad2d(b3, 1, out_p),
    )


@functools.partial(jax.jit, static_argnames=("out_features",))
def linear_qnet_forward(x, w1, b1, w2, b2, w3, b3, *, out_features):
    """Full MLP in one Pallas kernel, batch-tiled on a parallel grid."""
    batch, in_features = x.shape
    in_p, hid_p = w1.shape
    out_p = w3.shape[1]

    # Adaptive batch tile: small batches only pad to a sublane multiple,
    # large batches use fixed 128-row tiles (sharded across cores).
    if batch >= MAX_TILE_B:
        tile_b = MAX_TILE_B
    else:
        tile_b = _round_up(max(batch, 1), SUBLANE)

    # Pad batch to a tile multiple and the input features to the padded width.
    batch_p = _round_up(max(batch, 1), tile_b)
    xp = jnp.pad(x, ((0, batch_p - batch), (0, in_p - in_features)))

    grid = (batch_p // tile_b,)
    const = lambda i: (0, 0)  # weights/biases: same block every grid step (VMEM-resident)

    cost = pl.CostEstimate(
        flops=2 * batch_p * (in_p * hid_p + hid_p * hid_p + hid_p * out_p),
        transcendentals=0,
        bytes_accessed=4 * (batch_p * in_p + in_p * hid_p + hid_p * hid_p
                            + hid_p * out_p + 2 * hid_p + out_p + batch_p * out_p),
    )

    out_padded = pl.pallas_call(
        _mlp_kernel,
        out_shape=jax.ShapeDtypeStruct((batch_p, out_p), jnp.float32),
        grid=grid,
        in_specs=[
            pl.BlockSpec((tile_b, in_p), lambda i: (i, 0)),
            pl.BlockSpec((in_p, hid_p), const),
            pl.BlockSpec((1, hid_p), const),
            pl.BlockSpec((hid_p, hid_p), const),
            pl.BlockSpec((1, hid_p), const),
            pl.BlockSpec((hid_p, out_p), const),
            pl.BlockSpec((1, out_p), const),
        ],
        out_specs=pl.BlockSpec((tile_b, out_p), lambda i: (i, 0)),
        compiler_params=pltpu.CompilerParams(dimension_semantics=("parallel",)),
        cost_estimate=cost,
    )(xp, w1, b1, w2, b2, w3, b3)

    # Lane-dense store inside the kernel; slice to the true output width here
    # (fused by XLA with downstream ops).
    return out_padded[:batch, :out_features]


def init_params(key, input_size, hidden_size, output_size):
    """Deterministic init mirroring nn.Linear's uniform(-1/sqrt(fan_in), 1/sqrt(fan_in))."""
    ks = jax.random.split(key, 6)

    def linear(kw, kb, fan_in, fan_out):
        bound = 1.0 / jnp.sqrt(jnp.float32(fan_in))
        # stored as (in, out) so the kernel does x @ W (== x @ W_torch.T)
        w = jax.random.uniform(kw, (fan_in, fan_out), jnp.float32, -bound, bound)
        b = jax.random.uniform(kb, (1, fan_out), jnp.float32, -bound, bound)
        return w, b

    w1, b1 = linear(ks[0], ks[1], input_size, hidden_size)
    w2, b2 = linear(ks[2], ks[3], hidden_size, hidden_size)
    w3, b3 = linear(ks[4], ks[5], hidden_size, output_size)
    return w1, b1, w2, b2, w3, b3


def _reference(x, params):
    w1, b1, w2, b2, w3, b3 = params
    h = jnp.maximum(x @ w1 + b1, 0.0)
    h = jnp.maximum(h @ w2 + b2, 0.0)
    return h @ w3 + b3


if __name__ == "__main__":
    # Snake-game Q-net sizes: 11 state features -> 32 hidden -> 3 actions
    input_size, hidden_size, output_size = 11, 32, 3

    key = jax.random.PRNGKey(0)
    kx, kp, kx2, kx3 = jax.random.split(key, 4)
    params = init_params(kp, input_size, hidden_size, output_size)
    padded_params = pad_params(params)  # one-time lane-dense padding

    # Small correctness check (batch=2 -> 8-row adaptive tile, grid=(1,)).
    x_small = jax.random.normal(kx, (2, input_size), jnp.float32)
    out_small = jax.block_until_ready(
        linear_qnet_forward(x_small, *padded_params, out_features=output_size))
    ref_small = _reference(x_small, params)
    assert out_small.shape == (2, output_size)
    assert jnp.allclose(out_small, ref_small, atol=1e-5, rtol=1e-5)

    # Single-sample inference path (batch=1, as in game play).
    x_one = jax.random.normal(kx3, (1, input_size), jnp.float32)
    out_one = jax.block_until_ready(
        linear_qnet_forward(x_one, *padded_params, out_features=output_size))
    assert out_one.shape == (1, output_size)
    assert jnp.allclose(out_one, _reference(x_one, params), atol=1e-5, rtol=1e-5)

    # Larger batch exercising the parallel batch grid (2 tiles of 128 rows).
    x_big = jax.random.normal(kx2, (256, input_size), jnp.float32)
    out_big = jax.block_until_ready(
        linear_qnet_forward(x_big, *padded_params, out_features=output_size))
    ref_big = _reference(x_big, params)
    assert out_big.shape == (256, output_size)
    assert jnp.allclose(out_big, ref_big, atol=1e-5, rtol=1e-5)

    print("KERNEL_OK")
</pallas_src>

<mosaic_0001>
module attributes {stable_mosaic.version = 11 : i64} {
  func.func @_mlp_kernel(%arg0: i32, %arg1: memref<8x128xf32, #tpu.memory_space<vmem>>, %arg2: memref<128x128xf32, #tpu.memory_space<vmem>>, %arg3: memref<1x128xf32, #tpu.memory_space<vmem>>, %arg4: memref<128x128xf32, #tpu.memory_space<vmem>>, %arg5: memref<1x128xf32, #tpu.memory_space<vmem>>, %arg6: memref<128x128xf32, #tpu.memory_space<vmem>>, %arg7: memref<1x128xf32, #tpu.memory_space<vmem>>, %arg8: memref<8x128xf32, #tpu.memory_space<vmem>>) attributes {dimension_semantics = [#tpu.dimension_semantics<parallel>], iteration_bounds = array<i64: 1>, scalar_prefetch = 0 : i64, scratch_operands = 0 : i64, tpu.core_type = #tpu.core_type<tc>, window_params = [{transform_indices = @transform_0, window_bounds = array<i64: 8, 128>}, {pipeline_mode = #tpu.pipeline_mode<synchronous>, transform_indices = @transform_1, window_bounds = array<i64: 128, 128>}, {pipeline_mode = #tpu.pipeline_mode<synchronous>, transform_indices = @transform_2, window_bounds = array<i64: 1, 128>}, {pipeline_mode = #tpu.pipeline_mode<synchronous>, transform_indices = @transform_3, window_bounds = array<i64: 128, 128>}, {pipeline_mode = #tpu.pipeline_mode<synchronous>, transform_indices = @transform_4, window_bounds = array<i64: 1, 128>}, {pipeline_mode = #tpu.pipeline_mode<synchronous>, transform_indices = @transform_5, window_bounds = array<i64: 128, 128>}, {pipeline_mode = #tpu.pipeline_mode<synchronous>, transform_indices = @transform_6, window_bounds = array<i64: 1, 128>}, {transform_indices = @transform_7, window_bounds = array<i64: 8, 128>}]} {
    %c0 = arith.constant 0 : index
    %c0_0 = arith.constant 0 : index
    %0 = vector.load %arg1[%c0, %c0_0] : memref<8x128xf32, #tpu.memory_space<vmem>>, vector<8x128xf32>
    %c0_1 = arith.constant 0 : index
    %c0_2 = arith.constant 0 : index
    %1 = vector.load %arg2[%c0_1, %c0_2] : memref<128x128xf32, #tpu.memory_space<vmem>>, vector<128x128xf32>
    %cst = arith.constant dense<0.000000e+00> : vector<8x128xf32>
    %2 = tpu.matmul %0, %1, %cst {dimension_numbers = #tpu.dot_dimension_numbers<[1], [0], [0], [1], [0, 0, 1, 1], [], []>} : vector<8x128xf32>, vector<128x128xf32>, vector<8x128xf32> -> vector<8x128xf32>
    %c0_3 = arith.constant 0 : index
    %c0_4 = arith.constant 0 : index
    %3 = vector.load %arg3[%c0_3, %c0_4] : memref<1x128xf32, #tpu.memory_space<vmem>>, vector<1x128xf32>
    %4 = vector.broadcast %3 : vector<1x128xf32> to vector<8x128xf32>
    %5 = arith.addf %2, %4 : vector<8x128xf32>
    %cst_5 = arith.constant 0.000000e+00 : f32
    %6 = vector.broadcast %cst_5 : f32 to vector<8x128xf32>
    %7 = arith.maximumf %5, %6 : vector<8x128xf32>
    %c0_6 = arith.constant 0 : index
    %c0_7 = arith.constant 0 : index
    %8 = vector.load %arg4[%c0_6, %c0_7] : memref<128x128xf32, #tpu.memory_space<vmem>>, vector<128x128xf32>
    %cst_8 = arith.constant dense<0.000000e+00> : vector<8x128xf32>
    %9 = tpu.matmul %7, %8, %cst_8 {dimension_numbers = #tpu.dot_dimension_numbers<[1], [0], [0], [1], [0, 0, 1, 1], [], []>} : vector<8x128xf32>, vector<128x128xf32>, vector<8x128xf32> -> vector<8x128xf32>
    %c0_9 = arith.constant 0 : index
    %c0_10 = arith.constant 0 : index
    %10 = vector.load %arg5[%c0_9, %c0_10] : memref<1x128xf32, #tpu.memory_space<vmem>>, vector<1x128xf32>
    %11 = vector.broadcast %10 : vector<1x128xf32> to vector<8x128xf32>
    %12 = arith.addf %9, %11 : vector<8x128xf32>
    %cst_11 = arith.constant 0.000000e+00 : f32
    %13 = vector.broadcast %cst_11 : f32 to vector<8x128xf32>
    %14 = arith.maximumf %12, %13 : vector<8x128xf32>
    %c0_12 = arith.constant 0 : index
    %c0_13 = arith.constant 0 : index
    %15 = vector.load %arg6[%c0_12, %c0_13] : memref<128x128xf32, #tpu.memory_space<vmem>>, vector<128x128xf32>
    %cst_14 = arith.constant dense<0.000000e+00> : vector<8x128xf32>
    %16 = tpu.matmul %14, %15, %cst_14 {dimension_numbers = #tpu.dot_dimension_numbers<[1], [0], [0], [1], [0, 0, 1, 1], [], []>} : vector<8x128xf32>, vector<128x128xf32>, vector<8x128xf32> -> vector<8x128xf32>
    %c0_15 = arith.constant 0 : index
    %c0_16 = arith.constant 0 : index
    %17 = vector.load %arg7[%c0_15, %c0_16] : memref<1x128xf32, #tpu.memory_space<vmem>>, vector<1x128xf32>
    %18 = vector.broadcast %17 : vector<1x128xf32> to vector<8x128xf32>
    %19 = arith.addf %16, %18 : vector<8x128xf32>
    %c0_17 = arith.constant 0 : index
    %c0_18 = arith.constant 0 : index
    %20 = vector.load %arg8[%c0_17, %c0_18] : memref<8x128xf32, #tpu.memory_space<vmem>>, vector<8x128xf32>
    tpu.vector_store %arg8[%c0_17, %c0_18], %19 {strides = array<i32>} : memref<8x128xf32, #tpu.memory_space<vmem>>, vector<8x128xf32>,
    return
  }
  func.func @transform_0(%arg0: i32) -> (i32, i32) {
    %c0_i32 = arith.constant 0 : i32
    %c0_i32_0 = arith.constant 0 : i32
    return %arg0, %c0_i32 : i32, i32
  }
  func.func @transform_1(%arg0: i32) -> (i32, i32) {
    %c0_i32 = arith.constant 0 : i32
    %c0_i32_0 = arith.constant 0 : i32
    %c0_i32_1 = arith.constant 0 : i32
    return %c0_i32, %c0_i32_0 : i32, i32
  }
  func.func @transform_2(%arg0: i32) -> (i32, i32) {
    %c0_i32 = arith.constant 0 : i32
    %c0_i32_0 = arith.constant 0 : i32
    %c0_i32_1 = arith.constant 0 : i32
    return %c0_i32, %c0_i32_0 : i32, i32
  }
  func.func @transform_3(%arg0: i32) -> (i32, i32) {
    %c0_i32 = arith.constant 0 : i32
    %c0_i32_0 = arith.constant 0 : i32
    %c0_i32_1 = arith.constant 0 : i32
    return %c0_i32, %c0_i32_0 : i32, i32
  }
  func.func @transform_4(%arg0: i32) -> (i32, i32) {
    %c0_i32 = arith.constant 0 : i32
    %c0_i32_0 = arith.constant 0 : i32
    %c0_i32_1 = arith.constant 0 : i32
    return %c0_i32, %c0_i32_0 : i32, i32
  }
  func.func @transform_5(%arg0: i32) -> (i32, i32) {
    %c0_i32 = arith.constant 0 : i32
    %c0_i32_0 = arith.constant 0 : i32
    %c0_i32_1 = arith.constant 0 : i32
    return %c0_i32, %c0_i32_0 : i32, i32
  }
  func.func @transform_6(%arg0: i32) -> (i32, i32) {
    %c0_i32 = arith.constant 0 : i32
    %c0_i32_0 = arith.constant 0 : i32
    %c0_i32_1 = arith.constant 0 : i32
    return %c0_i32, %c0_i32_0 : i32, i32
  }
  func.func @transform_7(%arg0: i32) -> (i32, i32) {
    %c0_i32 = arith.constant 0 : i32
    %c0_i32_0 = arith.constant 0 : i32
    return %arg0, %c0_i32 : i32, i32
  }
}

</mosaic_0001>

<llo_original>
// kernel: linear_qnet_forward.1
$region0: #{linear_qnet_forward.1}
  #allocation0 [shape = 'u32[]', space=smem, size = 0x4, offset = 0x4, fixed_abs, tag = 'smem constant byte address 0x4 - core index']
  #allocation1 [shape = 'u32[144,128]{1,0:T(1,128)}', space=vmem, size = 0x12000, scoped, tag = 'internal scratch']
  %s0 = inlined_call_operand.vmem [shape: f32[8,128], index: 0, kind: input, shape index: {}]
  %s1 = inlined_call_operand.hbm [shape: f32[128,128], index: 1, kind: input, shape index: {}]
  %s2 = inlined_call_operand.vmem [shape: f32[1,128], index: 2, kind: input, shape index: {}]
  %s3 = inlined_call_operand.hbm [shape: f32[128,128], index: 3, kind: input, shape index: {}]
  %s4 = inlined_call_operand.vmem [shape: f32[1,128], index: 4, kind: input, shape index: {}]
  %s5 = inlined_call_operand.hbm [shape: f32[128,128], index: 5, kind: input, shape index: {}]
  %s6 = inlined_call_operand.vmem [shape: f32[1,128], index: 6, kind: input, shape index: {}]
  %s7 = inlined_call_operand.vmem [shape: f32[8,128], index: 7, kind: output, shape index: {}]
  %s8 = sld [smem:[#allocation0]]
  $region50: #{linear_qnet_forward.1} parent=0
    _
  %s10 = ssub.s32 1, %s8
  %s11 = scalar_select 0, %s10, %s8
  $region1: #{linear_qnet_forward.1} parent=0
    #allocation2 [shape = 'u8[65536]{0}', space=vmem, size = 0x10000, scoped, tag = 'input window, operand 1, single buffered']
    #allocation3 [shape = 's32[1]{0}', space=sflag, size = 0x4, scoped, tag = 'scoped memory for linear_qnet_forward.1']
    #allocation4 [shape = 'u8[65536]{0}', space=vmem, size = 0x10000, scoped, tag = 'input window, operand 3, single buffered']
    #allocation5 [shape = 's32[1]{0}', space=sflag, size = 0x4, scoped, tag = 'scoped memory for linear_qnet_forward.1']
    #allocation6 [shape = 'u8[65536]{0}', space=vmem, size = 0x10000, scoped, tag = 'input window, operand 5, single buffered']
    %12 = vsyncpa [#allocation3], 0
    %13 = vsyncpa [#allocation5], 0
    // Predicated region
    $region2: #{linear_qnet_forward.1} parent=1 // pred_check
      _
    $region3: #{linear_qnet_forward.1} parent=1 // pred_check_branch
      %15 = sbr.rel (0) target = $region5
    $region4: #{linear_qnet_forward.1} parent=1 // pred_region
      _
    $region5: #{linear_qnet_forward.1} parent=1 // pred_fallthru
      _
    // Predicated region
    $region6: #{linear_qnet_forward.1} parent=1 // pred_check
      _
    $region7: #{linear_qnet_forward.1} parent=1 // pred_check_branch
      %17 = sbr.rel (0) target = $region9
    $region8: #{linear_qnet_forward.1} parent=1 // pred_region
      %s19 = ssub.s32 2048, 2048
      %20 = vsyncadd [#allocation3], %s19
      %s21 = sshll.u32 [#allocation2], 4
      %s22 = int_to_ptr.vmem [resolvable:$true] %s21
      %27 = dma.hbm_to_vmem [thread:$0]  %s1, 2048, %s22, [#allocation3], 128, 128, 8
    $region9: #{linear_qnet_forward.1} parent=1 // pred_fallthru
      _
    // Predicated region
    $region10: #{linear_qnet_forward.1} parent=1 // pred_check
      _
    $region11: #{linear_qnet_forward.1} parent=1 // pred_check_branch
      %29 = sbr.rel (0) target = $region13
    $region12: #{linear_qnet_forward.1} parent=1 // pred_region
      _
    $region13: #{linear_qnet_forward.1} parent=1 // pred_fallthru
      _
    // Predicated region
    $region14: #{linear_qnet_forward.1} parent=1 // pred_check
      _
    $region15: #{linear_qnet_forward.1} parent=1 // pred_check_branch
      %31 = sbr.rel (0) target = $region17
    $region16: #{linear_qnet_forward.1} parent=1 // pred_region
      %s33 = ssub.s32 2048, 2048
      %34 = vsyncadd [#allocation5], %s33
      %s35 = sshll.u32 [#allocation4], 4
      %s36 = int_to_ptr.vmem [resolvable:$true] %s35
      %41 = dma.hbm_to_vmem [thread:$0]  %s3, 2048, %s36, [#allocation5], 128, 128, 8
    $region17: #{linear_qnet_forward.1} parent=1 // pred_fallthru
      _
    // Predicated region
    $region18: #{linear_qnet_forward.1} parent=1 // pred_check
      _
    $region19: #{linear_qnet_forward.1} parent=1 // pred_check_branch
      %43 = sbr.rel (0) target = $region21
    $region20: #{linear_qnet_forward.1} parent=1 // pred_region
      _
    $region21: #{linear_qnet_forward.1} parent=1 // pred_fallthru
      _
    // Predicated region
    $region22: #{linear_qnet_forward.1} parent=1 // pred_check
      _
    $region23: #{linear_qnet_forward.1} parent=1 // pred_check_branch
      %45 = sbr.rel (0) target = $region25
    $region24: #{linear_qnet_forward.1} parent=1 // pred_region
      %s47 = ssub.s32 2048, 2048
      %48 = vsyncadd [#allocation5], %s47
      %s49 = sshll.u32 [#allocation6], 4
      %s50 = int_to_ptr.vmem [resolvable:$true] %s49
      %55 = dma.hbm_to_vmem [thread:$0]  %s5, 2048, %s50, [#allocation5], 128, 128, 8
    $region25: #{linear_qnet_forward.1} parent=1 // pred_fallthru
      _
    // Predicated region
    $region26: #{linear_qnet_forward.1} parent=1 // pred_check
      _
    $region27: #{linear_qnet_forward.1} parent=1 // pred_check_branch
      %57 = sbr.rel (0) target = $region29
    $region28: #{linear_qnet_forward.1} parent=1 // pred_region
      _
    $region29: #{linear_qnet_forward.1} parent=1 // pred_fallthru
      _
    // Predicated region
    $region30: #{linear_qnet_forward.1} parent=1 // pred_check
      _
    $region31: #{linear_qnet_forward.1} parent=1 // pred_check_branch
      %59 = sbr.rel (0) target = $region33
    $region32: #{linear_qnet_forward.1} parent=1 // pred_region
      %60 = dma.done [#allocation3], 2048
    $region33: #{linear_qnet_forward.1} parent=1 // pred_fallthru
      _
    // Predicated region
    $region34: #{linear_qnet_forward.1} parent=1 // pred_check
      _
    $region35: #{linear_qnet_forward.1} parent=1 // pred_check_branch
      %62 = sbr.rel (0) target = $region37
    $region36: #{linear_qnet_forward.1} parent=1 // pred_region
      %63 = dma.done [#allocation5], 2048
    $region37: #{linear_qnet_forward.1} parent=1 // pred_fallthru
      _
    // Predicated region
    $region38: #{linear_qnet_forward.1} parent=1 // pred_check
      _
    $region39: #{linear_qnet_forward.1} parent=1 // pred_check_branch
      %65 = sbr.rel (0) target = $region41
    $region40: #{linear_qnet_forward.1} parent=1 // pred_region
      %66 = dma.done [#allocation5], 2048
    $region41: #{linear_qnet_forward.1} parent=1 // pred_fallthru
      _
    %v67 = vld [vmem:[%s0] sm:$0xff]
    %v68 = vld [vmem:[#allocation2] sm:$0xff]
    %v69 = vld [vmem:[#allocation2 + $0x8] sm:$0xff]
    %v70 = vld [vmem:[#allocation2 + $0x10] sm:$0xff]
    %v71 = vld [vmem:[#allocation2 + $0x18] sm:$0xff]
    %v72 = vld [vmem:[#allocation2 + $0x20] sm:$0xff]
    %v73 = vld [vmem:[#allocation2 + $0x28] sm:$0xff]
    %v74 = vld [vmem:[#allocation2 + $0x30] sm:$0xff]
    %v75 = vld [vmem:[#allocation2 + $0x38] sm:$0xff]
    %v76 = vld [vmem:[#allocation2 + $0x40] sm:$0xff]
    %v77 = vld [vmem:[#allocation2 + $0x48] sm:$0xff]
    %v78 = vld [vmem:[#allocation2 + $0x50] sm:$0xff]
    %v79 = vld [vmem:[#allocation2 + $0x58] sm:$0xff]
    %v80 = vld [vmem:[#allocation2 + $0x60] sm:$0xff]
    %v81 = vld [vmem:[#allocation2 + $0x68] sm:$0xff]
    %v82 = vld [vmem:[#allocation2 + $0x70] sm:$0xff]
    %v83 = vld [vmem:[#allocation2 + $0x78] sm:$0xff]
    %v84 = vld [vmem:[%s2] sm:$0x1]
    %v86 = vlaneseq
    %v87 = vshrl.u32 %v86, 7
    %v88 = vsub.s32 0, %v87
    %v89 = vrot.slane %v84, %v88
    %91 = vmatprep.subr.mxu0 0.0
    %92 = vmatpush1.msra.mxu0 %v83
    %93 = vmatprep.subr.mxu0 0.0
    %94 = vmatpush1.msra.mxu0 %v82
    %95 = vmatprep.subr.mxu0 0.0
    %96 = vmatpush1.msra.mxu0 %v81
    %97 = vmatprep.subr.mxu0 0.0
    %98 = vmatpush1.msra.mxu0 %v80
    %99 = vmatprep.subr.mxu0 0.0
    %100 = vmatpush1.msra.mxu0 %v79
    %101 = vmatprep.subr.mxu0 0.0
    %102 = vmatpush1.msra.mxu0 %v78
    %103 = vmatprep.subr.mxu0 0.0
    %104 = vmatpush1.msra.mxu0 %v77
    %105 = vmatprep.subr.mxu0 0.0
    %106 = vmatpush1.msra.mxu0 %v76
    %107 = vmatprep.subr.mxu0 0.0
    %108 = vmatpush1.msra.mxu0 %v75
    %109 = vmatprep.subr.mxu0 0.0
    %110 = vmatpush1.msra.mxu0 %v74
    %111 = vmatprep.subr.mxu0 0.0
    %112 = vmatpush1.msra.mxu0 %v73
    %113 = vmatprep.subr.mxu0 0.0
    %114 = vmatpush1.msra.mxu0 %v72
    %115 = vmatprep.subr.mxu0 0.0
    %116 = vmatpush1.msra.mxu0 %v71
    %117 = vmatprep.subr.mxu0 0.0
    %118 = vmatpush1.msra.mxu0 %v70
    %119 = vmatprep.subr.mxu0 0.0
    %120 = vmatpush1.msra.mxu0 %v69
    %121 = vmatprep.subr.mxu0 0.0
    %122 = vmatpush1.msra.mxu0 %v68
    %123 = vmatprep.subr.mxu0 0.0
    %124 = vmatpush2.msra.mxu0 0.0
    %125 = vmatprep.subr.mxu0 0.0
    %126 = vmatpush2.msra.mxu0 0.0
    %127 = vmatprep.subr.mxu0 0.0
    %128 = vmatpush2.msra.mxu0 0.0
    %129 = vmatprep.subr.mxu0 0.0
    %130 = vmatpush2.msra.mxu0 0.0
    %131 = vmatprep.subr.mxu0 0.0
    %132 = vmatpush2.msra.mxu0 0.0
    %133 = vmatprep.subr.mxu0 0.0
    %134 = vmatpush2.msra.mxu0 0.0
    %135 = vmatprep.subr.mxu0 0.0
    %136 = vmatpush2.msra.mxu0 0.0
    %137 = vmatprep.subr.mxu0 0.0
    %138 = vmatpush2.msra.mxu0 0.0
    %139 = vmatprep.subr.mxu0 0.0
    %140 = vmatpush2.msra.mxu0 0.0
    %141 = vmatprep.subr.mxu0 0.0
    %142 = vmatpush2.msra.mxu0 0.0
    %143 = vmatprep.subr.mxu0 0.0
    %144 = vmatpush2.msra.mxu0 0.0
    %145 = vmatprep.subr.mxu0 0.0
    %146 = vmatpush2.msra.mxu0 0.0
    %147 = vmatprep.subr.mxu0 0.0
    %148 = vmatpush2.msra.mxu0 0.0
    %149 = vmatprep.subr.mxu0 0.0
    %150 = vmatpush2.msra.mxu0 0.0
    %151 = vmatprep.subr.mxu0 0.0
    %152 = vmatpush2.msra.mxu0 0.0
    %153 = vmatprep.subr.mxu0 0.0
    %154 = vmatpush2.msra.mxu0 0.0
    %155 = vmatprep.mubr.f32.mxu0 0.0
    %156 = vmatmul.mubr.f32.gmra.mxu0 %v67
    %v157 = vpop.f32.mrf.mxu0
    %v158 = vadd.f32 %v89, %v157
    %v159 = vpop.f32.mrf.mxu0
    %160 = vdwg.mxu0
    %v161 = vmax.f32 %v158, 0.0
    %v162 = vld [vmem:[#allocation4] sm:$0xff]
    %v163 = vld [vmem:[#allocation4 + $0x8] sm:$0xff]
    %v164 = vld [vmem:[#allocation4 + $0x10] sm:$0xff]
    %v165 = vld [vmem:[#allocation4 + $0x18] sm:$0xff]
    %v166 = vld [vmem:[#allocation4 + $0x20] sm:$0xff]
    %v167 = vld [vmem:[#allocation4 + $0x28] sm:$0xff]
    %v168 = vld [vmem:[#allocation4 + $0x30] sm:$0xff]
    %v169 = vld [vmem:[#allocation4 + $0x38] sm:$0xff]
    %v170 = vld [vmem:[#allocation4 + $0x40] sm:$0xff]
    %v171 = vld [vmem:[#allocation4 + $0x48] sm:$0xff]
    %v172 = vld [vmem:[#allocation4 + $0x50] sm:$0xff]
    %v173 = vld [vmem:[#allocation4 + $0x58] sm:$0xff]
    %v174 = vld [vmem:[#allocation4 + $0x60] sm:$0xff]
    %v175 = vld [vmem:[#allocation4 + $0x68] sm:$0xff]
    %v176 = vld [vmem:[#allocation4 + $0x70] sm:$0xff]
    %v177 = vld [vmem:[#allocation4 + $0x78] sm:$0xff]
    %v178 = vld [vmem:[%s4] sm:$0x1]
    %v180 = vlaneseq
    %v181 = vshrl.u32 %v180, 7
    %v182 = vsub.s32 0, %v181
    %v183 = vrot.slane %v178, %v182
    %185 = vmatprep.subr.mxu0 0.0
    %186 = vmatpush1.msra.mxu0 %v177
    %187 = vmatprep.subr.mxu0 0.0
    %188 = vmatpush1.msra.mxu0 %v176
    %189 = vmatprep.subr.mxu0 0.0
    %190 = vmatpush1.msra.mxu0 %v175
    %191 = vmatprep.subr.mxu0 0.0
    %192 = vmatpush1.msra.mxu0 %v174
    %193 = vmatprep.subr.mxu0 0.0
    %194 = vmatpush1.msra.mxu0 %v173
    %195 = vmatprep.subr.mxu0 0.0
    %196 = vmatpush1.msra.mxu0 %v172
    %197 = vmatprep.subr.mxu0 0.0
    %198 = vmatpush1.msra.mxu0 %v171
    %199 = vmatprep.subr.mxu0 0.0
    %200 = vmatpush1.msra.mxu0 %v170
    %201 = vmatprep.subr.mxu0 0.0
    %202 = vmatpush1.msra.mxu0 %v169
    %203 = vmatprep.subr.mxu0 0.0
    %204 = vmatpush1.msra.mxu0 %v168
    %205 = vmatprep.subr.mxu0 0.0
    %206 = vmatpush1.msra.mxu0 %v167
    %207 = vmatprep.subr.mxu0 0.0
    %208 = vmatpush1.msra.mxu0 %v166
    %209 = vmatprep.subr.mxu0 0.0
    %210 = vmatpush1.msra.mxu0 %v165
    %211 = vmatprep.subr.mxu0 0.0
    %212 = vmatpush1.msra.mxu0 %v164
    %213 = vmatprep.subr.mxu0 0.0
    %214 = vmatpush1.msra.mxu0 %v163
    %215 = vmatprep.subr.mxu0 0.0
    %216 = vmatpush1.msra.mxu0 %v162
    %217 = vmatprep.subr.mxu0 0.0
    %218 = vmatpush2.msra.mxu0 0.0
    %219 = vmatprep.subr.mxu0 0.0
    %220 = vmatpush2.msra.mxu0 0.0
    %221 = vmatprep.subr.mxu0 0.0
    %222 = vmatpush2.msra.mxu0 0.0
    %223 = vmatprep.subr.mxu0 0.0
    %224 = vmatpush2.msra.mxu0 0.0
    %225 = vmatprep.subr.mxu0 0.0
    %226 = vmatpush2.msra.mxu0 0.0
    %227 = vmatprep.subr.mxu0 0.0
    %228 = vmatpush2.msra.mxu0 0.0
    %229 = vmatprep.subr.mxu0 0.0
    %230 = vmatpush2.msra.mxu0 0.0
    %231 = vmatprep.subr.mxu0 0.0
    %232 = vmatpush2.msra.mxu0 0.0
    %233 = vmatprep.subr.mxu0 0.0
    %234 = vmatpush2.msra.mxu0 0.0
    %235 = vmatprep.subr.mxu0 0.0
    %236 = vmatpush2.msra.mxu0 0.0
    %237 = vmatprep.subr.mxu0 0.0
    %238 = vmatpush2.msra.mxu0 0.0
    %239 = vmatprep.subr.mxu0 0.0
    %240 = vmatpush2.msra.mxu0 0.0
    %241 = vmatprep.subr.mxu0 0.0
    %242 = vmatpush2.msra.mxu0 0.0
    %243 = vmatprep.subr.mxu0 0.0
    %244 = vmatpush2.msra.mxu0 0.0
    %245 = vmatprep.subr.mxu0 0.0
    %246 = vmatpush2.msra.mxu0 0.0
    %247 = vmatprep.subr.mxu0 0.0
    %248 = vmatpush2.msra.mxu0 0.0
    %249 = vmatprep.mubr.f32.mxu0 0.0
    %250 = vmatmul.mubr.f32.gmra.mxu0 %v161
    %v251 = vpop.f32.mrf.mxu0
    %v252 = vadd.f32 %v183, %v251
    %v253 = vpop.f32.mrf.mxu0
    %254 = vdwg.mxu0
    %v255 = vmax.f32 %v252, 0.0
    %v256 = vld [vmem:[#allocation6] sm:$0xff]
    %v257 = vld [vmem:[#allocation6 + $0x8] sm:$0xff]
    %v258 = vld [vmem:[#allocation6 + $0x10] sm:$0xff]
    %v259 = vld [vmem:[#allocation6 + $0x18] sm:$0xff]
    %v260 = vld [vmem:[#allocation6 + $0x20] sm:$0xff]
    %v261 = vld [vmem:[#allocation6 + $0x28] sm:$0xff]
    %v262 = vld [vmem:[#allocation6 + $0x30] sm:$0xff]
    %v263 = vld [vmem:[#allocation6 + $0x38] sm:$0xff]
    %v264 = vld [vmem:[#allocation6 + $0x40] sm:$0xff]
    %v265 = vld [vmem:[#allocation6 + $0x48] sm:$0xff]
    %v266 = vld [vmem:[#allocation6 + $0x50] sm:$0xff]
    %v267 = vld [vmem:[#allocation6 + $0x58] sm:$0xff]
    %v268 = vld [vmem:[#allocation6 + $0x60] sm:$0xff]
    %v269 = vld [vmem:[#allocation6 + $0x68] sm:$0xff]
    %v270 = vld [vmem:[#allocation6 + $0x70] sm:$0xff]
    %v271 = vld [vmem:[#allocation6 + $0x78] sm:$0xff]
    %v272 = vld [vmem:[%s6] sm:$0x1]
    %v274 = vlaneseq
    %v275 = vshrl.u32 %v274, 7
    %v276 = vsub.s32 0, %v275
    %v277 = vrot.slane %v272, %v276
    %279 = vmatprep.subr.mxu0 0.0
    %280 = vmatpush1.msra.mxu0 %v271
    %281 = vmatprep.subr.mxu0 0.0
    %282 = vmatpush1.msra.mxu0 %v270
    %283 = vmatprep.subr.mxu0 0.0
    %284 = vmatpush1.msra.mxu0 %v269
    %285 = vmatprep.subr.mxu0 0.0
    %286 = vmatpush1.msra.mxu0 %v268
    %287 = vmatprep.subr.mxu0 0.0
    %288 = vmatpush1.msra.mxu0 %v267
    %289 = vmatprep.subr.mxu0 0.0
    %290 = vmatpush1.msra.mxu0 %v266
    %291 = vmatprep.subr.mxu0 0.0
    %292 = vmatpush1.msra.mxu0 %v265
    %293 = vmatprep.subr.mxu0 0.0
    %294 = vmatpush1.msra.mxu0 %v264
    %295 = vmatprep.subr.mxu0 0.0
    %296 = vmatpush1.msra.mxu0 %v263
    %297 = vmatprep.subr.mxu0 0.0
    %298 = vmatpush1.msra.mxu0 %v262
    %299 = vmatprep.subr.mxu0 0.0
    %300 = vmatpush1.msra.mxu0 %v261
    %301 = vmatprep.subr.mxu0 0.0
    %302 = vmatpush1.msra.mxu0 %v260
    %303 = vmatprep.subr.mxu0 0.0
    %304 = vmatpush1.msra.mxu0 %v259
    %305 = vmatprep.subr.mxu0 0.0
    %306 = vmatpush1.msra.mxu0 %v258
    %307 = vmatprep.subr.mxu0 0.0
    %308 = vmatpush1.msra.mxu0 %v257
    %309 = vmatprep.subr.mxu0 0.0
    %310 = vmatpush1.msra.mxu0 %v256
    %311 = vmatprep.subr.mxu0 0.0
    %312 = vmatpush2.msra.mxu0 0.0
    %313 = vmatprep.subr.mxu0 0.0
    %314 = vmatpush2.msra.mxu0 0.0
    %315 = vmatprep.subr.mxu0 0.0
    %316 = vmatpush2.msra.mxu0 0.0
    %317 = vmatprep.subr.mxu0 0.0
    %318 = vmatpush2.msra.mxu0 0.0
    %319 = vmatprep.subr.mxu0 0.0
    %320 = vmatpush2.msra.mxu0 0.0
    %321 = vmatprep.subr.mxu0 0.0
    %322 = vmatpush2.msra.mxu0 0.0
    %323 = vmatprep.subr.mxu0 0.0
    %324 = vmatpush2.msra.mxu0 0.0
    %325 = vmatprep.subr.mxu0 0.0
    %326 = vmatpush2.msra.mxu0 0.0
    %327 = vmatprep.subr.mxu0 0.0
    %328 = vmatpush2.msra.mxu0 0.0
    %329 = vmatprep.subr.mxu0 0.0
    %330 = vmatpush2.msra.mxu0 0.0
    %331 = vmatprep.subr.mxu0 0.0
    %332 = vmatpush2.msra.mxu0 0.0
    %333 = vmatprep.subr.mxu0 0.0
    %334 = vmatpush2.msra.mxu0 0.0
    %335 = vmatprep.subr.mxu0 0.0
    %336 = vmatpush2.msra.mxu0 0.0
    %337 = vmatprep.subr.mxu0 0.0
    %338 = vmatpush2.msra.mxu0 0.0
    %339 = vmatprep.subr.mxu0 0.0
    %340 = vmatpush2.msra.mxu0 0.0
    %341 = vmatprep.subr.mxu0 0.0
    %342 = vmatpush2.msra.mxu0 0.0
    %343 = vmatprep.mubr.f32.mxu0 0.0
    %344 = vmatmul.mubr.f32.gmra.mxu0 %v255
    %v345 = vpop.f32.mrf.mxu0
    %v346 = vadd.f32 %v277, %v345
    %v347 = vpop.f32.mrf.mxu0
    %348 = vdwg.mxu0
    %349 = vst [vmem:[%s7] sm:$0xff] %v346
    // Predicated region
    $region42: #{linear_qnet_forward.1} parent=1 // pred_check
      _
    $region43: #{linear_qnet_forward.1} parent=1 // pred_check_branch
      %351 = sbr.rel (0) target = $region45
    $region44: #{linear_qnet_forward.1} parent=1 // pred_region
      _
    $region45: #{linear_qnet_forward.1} parent=1 // pred_fallthru
      _
    // Predicated region
    $region46: #{linear_qnet_forward.1} parent=1 // pred_check
      _
    $region47: #{linear_qnet_forward.1} parent=1 // pred_check_branch
      %353 = sbr.rel (0) target = $region49
    $region48: #{linear_qnet_forward.1} parent=1 // pred_region
      _
    $region49: #{linear_qnet_forward.1} parent=1 // pred_fallthru
      _
    %354 = vsyncpa [#allocation3], 1
    %355 = vsyncpa [#allocation5], 1

</llo_original>
